<compile_context>
chip_gen: v6e
topology: v6e:2x2x1
jax: 0.10.0
libtpu: 0.0.40
codegen_flags: <defaults>
</compile_context>

<pallas_src>
import functools

import jax
import jax.numpy as jnp
import numpy as np
from jax.experimental import pallas as pl
from jax.experimental.pallas import tpu as pltpu


def _log_sigmoid(x):
    # numerically stable log(sigmoid(x)) = min(x, 0) - log1p(exp(-|x|))
    return jnp.minimum(x, 0.0) - jnp.log1p(jnp.exp(-jnp.abs(x)))


def _round_up(x, m):
    return ((x + m - 1) // m) * m


def pack_bf16_rows(table_bf16):
    """(V, D) bf16 -> (V, D//2) int32, two bf16 values per 32-bit word."""
    v, d = table_bf16.shape
    assert d % 2 == 0, "embedding dimension must be even for bf16 packing"
    return jax.lax.bitcast_convert_type(
        table_bf16.reshape(v, d // 2, 2), jnp.int32)


def _unpack_to_f32(w_i32):
    """int32 words holding two packed bf16 -> two exact f32 arrays (same shape)."""
    lo = pltpu.bitcast(w_i32 << 16, jnp.float32)                  # low 16 bits
    hi = pltpu.bitcast(w_i32 & jnp.int32(-65536), jnp.float32)    # high 16 bits
    return lo, hi


def _skipgram_kernel(tgt_ref, ctx_ref, neg_ref,      # scalar prefetch (SMEM)
                     u_hbm, v_hbm,                   # packed tables (HBM, ANY)
                     out_ref,                        # (1,1,8,128) partial block
                     ubuf, vbuf, nbuf, sem,          # scratch
                     *, TB, K, GI, B):
    o = pl.program_id(0)          # parallel group (megacore axis)
    i = pl.program_id(1)          # tile within the group (serial axis)
    tile = o * GI + i
    slot = i % 2

    def issue_gather(tile_idx, slot_idx):
        base = tile_idx * TB

        def issue_row(r, carry):
            row = base + r
            pltpu.make_async_copy(
                u_hbm.at[pl.ds(tgt_ref[row], 1), :],
                ubuf.at[slot_idx, pl.ds(r, 1), :],
                sem.at[slot_idx, 0]).start()
            pltpu.make_async_copy(
                v_hbm.at[pl.ds(ctx_ref[row], 1), :],
                vbuf.at[slot_idx, pl.ds(r, 1), :],
                sem.at[slot_idx, 1]).start()
            for k in range(K):
                pltpu.make_async_copy(
                    v_hbm.at[pl.ds(neg_ref[row * K + k], 1), :],
                    nbuf.at[slot_idx, k, pl.ds(r, 1), :],
                    sem.at[slot_idx, 2]).start()
            return carry

        jax.lax.fori_loop(0, TB, issue_row, 0)

    def wait_gather(slot_idx):
        # One wait per issued copy, with matching (1, D2) shapes.
        def wait_row(r, carry):
            pltpu.make_async_copy(
                u_hbm.at[pl.ds(0, 1), :],
                ubuf.at[slot_idx, pl.ds(0, 1), :],
                sem.at[slot_idx, 0]).wait()
            pltpu.make_async_copy(
                v_hbm.at[pl.ds(0, 1), :],
                vbuf.at[slot_idx, pl.ds(0, 1), :],
                sem.at[slot_idx, 1]).wait()
            for k in range(K):
                pltpu.make_async_copy(
                    v_hbm.at[pl.ds(0, 1), :],
                    nbuf.at[slot_idx, 0, pl.ds(0, 1), :],
                    sem.at[slot_idx, 2]).wait()
            return carry

        jax.lax.fori_loop(0, TB, wait_row, 0)

    # First tile of this group: gather into this step's slot.
    @pl.when(i == 0)
    def _():
        issue_gather(tile, slot)

    # Double-buffer: prefetch the next tile of this group into the other slot.
    @pl.when(i + 1 < GI)
    def _():
        issue_gather(tile + 1, 1 - slot)

    wait_gather(slot)

    # Unpack 2xbf16-per-int32 to exact f32 halves.  Dot products over D are
    # order invariant, so the lo/hi halves never need re-interleaving.
    u_lo, u_hi = _unpack_to_f32(ubuf[slot])          # (TB, D2) each
    v_lo, v_hi = _unpack_to_f32(vbuf[slot])          # (TB, D2) each
    n_lo, n_hi = _unpack_to_f32(nbuf[slot])          # (K, TB, D2) each
    ns_lo = jnp.sum(n_lo, axis=0)                    # reduce over K first
    ns_hi = jnp.sum(n_hi, axis=0)                    # (TB, D2)

    pos_score = jnp.sum(u_lo * v_lo + u_hi * v_hi, axis=1, keepdims=True)   # (TB,1)
    neg_score = jnp.sum(u_lo * ns_lo + u_hi * ns_hi, axis=1, keepdims=True)  # (TB,1)
    row_loss = _log_sigmoid(pos_score) + _log_sigmoid(-neg_score)            # (TB,1)

    # Mask padded rows of the last (partial) tile.
    rows = tile * TB + jax.lax.broadcasted_iota(jnp.int32, (TB, 1), 0)
    row_loss = jnp.where(rows < B, row_loss, 0.0)

    # Lane-dense, (8,128)-aligned partial-sum output block.
    out_ref[...] = jnp.full(out_ref.shape, jnp.sum(row_loss), dtype=jnp.float32)


def skipgram_loss(u_packed, v_packed, target_word, context_word, neg_word,
                  *, tb=256, num_parallel=2):
    """Fused gather + SkipGram loss.  Tables are (V, D//2) int32 (packed bf16)."""
    B = int(target_word.shape[0])
    K = int(neg_word.shape[1])
    _, D2 = u_packed.shape

    TB = _round_up(max(1, min(int(tb), B)), 8)     # sublane-aligned batch tile
    tiles = int(pl.cdiv(B, TB))
    NC = max(1, min(int(num_parallel), tiles))     # parallel groups (v7x: 2 TCs)
    GI = int(pl.cdiv(tiles, NC))                   # tiles per group (pipelined)
    total_tiles = NC * GI
    pad = total_tiles * TB - B

    tgt = jnp.pad(jnp.asarray(target_word, jnp.int32), (0, pad))
    ctx = jnp.pad(jnp.asarray(context_word, jnp.int32), (0, pad))
    neg = jnp.pad(jnp.asarray(neg_word, jnp.int32).reshape(-1), (0, pad * K))

    kernel = functools.partial(_skipgram_kernel, TB=TB, K=K, GI=GI, B=B)

    grid_spec = pltpu.PrefetchScalarGridSpec(
        num_scalar_prefetch=3,
        grid=(NC, GI),
        in_specs=[
            pl.BlockSpec(memory_space=pl.ANY),     # packed U table (stays in HBM)
            pl.BlockSpec(memory_space=pl.ANY),     # packed V table (stays in HBM)
        ],
        out_specs=pl.BlockSpec((1, 1, 8, 128), lambda o, i, *_: (o, i, 0, 0)),
        scratch_shapes=[
            pltpu.VMEM((2, TB, D2), jnp.int32),      # gathered U rows, double-buffered
            pltpu.VMEM((2, TB, D2), jnp.int32),      # gathered V rows
            pltpu.VMEM((2, K, TB, D2), jnp.int32),   # gathered negative rows
            pltpu.SemaphoreType.DMA((2, 3)),         # per-slot, per-stream DMA sems
        ],
    )

    partials = pl.pallas_call(
        kernel,
        out_shape=jax.ShapeDtypeStruct((NC, GI, 8, 128), jnp.float32),
        grid_spec=grid_spec,
        compiler_params=pltpu.CompilerParams(
            dimension_semantics=("parallel", "arbitrary")),
    )(tgt, ctx, neg, u_packed, v_packed)

    # Tiny final reduction / mean / negation in plain JAX.
    return -(jnp.sum(partials[:, :, 0, 0]) / B)


class SkipGramModelPallas:
    """JAX/Pallas port of deepwalk SkipGramModel (forward pass)."""

    def __init__(self, emb_size, emb_dimension, key):
        self.emb_size = emb_size
        self.emb_dimension = emb_dimension
        initrange = (2.0 / (emb_size + emb_dimension)) ** 0.5
        ku, kv = jax.random.split(key)
        # bf16 storage halves the HBM bytes moved by the in-kernel gather;
        # all compute stays f32 inside the kernel.
        self.u_embeddings = jax.random.uniform(
            ku, (emb_size, emb_dimension), jnp.float32,
            -initrange, initrange).astype(jnp.bfloat16)
        # NOTE: the PyTorch init zeroes v_embeddings (degenerate constant loss);
        # use a small uniform init so the kernel compute path is exercised.
        self.v_embeddings = jax.random.uniform(
            kv, (emb_size, emb_dimension), jnp.float32,
            -initrange, initrange).astype(jnp.bfloat16)
        # Pack 2 x bf16 -> int32 once so per-row gather DMAs are 32-bit clean.
        self._u_packed = pack_bf16_rows(self.u_embeddings)
        self._v_packed = pack_bf16_rows(self.v_embeddings)

    def forward(self, target_word, context_word, neg_word, *,
                tb=256, num_parallel=2):
        return skipgram_loss(self._u_packed, self._v_packed,
                             target_word, context_word, neg_word,
                             tb=tb, num_parallel=num_parallel)


def _reference_loss(u_emb, v_emb, target_word, context_word, neg_word):
    emb_u = jnp.take(u_emb, target_word, axis=0).astype(jnp.float32)
    emb_v = jnp.take(v_emb, context_word, axis=0).astype(jnp.float32)
    emb_n = jnp.take(v_emb, neg_word, axis=0).astype(jnp.float32)
    positive = _log_sigmoid(jnp.sum(emb_u * emb_v, axis=1))
    neg_scores = jnp.einsum('bkd,bd->bk', emb_n, emb_u)
    negative = _log_sigmoid(-jnp.sum(neg_scores, axis=1))
    return -jnp.mean(positive + negative)


if __name__ == "__main__":
    key = jax.random.PRNGKey(0)
    emb_size, emb_dim = 512, 256   # vocab, emb dim (mult. of 256 -> lane-dense packed rows)
    B, K = 30, 4                   # batch (not a multiple of the tile -> exercises masking)

    k_model, k_t, k_c, k_n = jax.random.split(key, 4)
    model = SkipGramModelPallas(emb_size, emb_dim, k_model)

    target_word = jax.random.randint(k_t, (B,), 0, emb_size)
    context_word = jax.random.randint(k_c, (B,), 0, emb_size)
    neg_word = jax.random.randint(k_n, (B, K), 0, emb_size)

    # Small tile / two parallel groups so the demo exercises both the
    # double-buffered gather pipeline and the megacore-parallel partials
    # (grid = (2, 2), 8 rows per tile, 2 padded rows masked out).
    loss = model.forward(target_word, context_word, neg_word,
                         tb=8, num_parallel=2)
    loss = jax.block_until_ready(loss)

    ref = _reference_loss(model.u_embeddings, model.v_embeddings,
                          target_word, context_word, neg_word)
    np.testing.assert_allclose(np.asarray(loss), np.asarray(ref),
                               rtol=1e-4, atol=1e-5)
    print("KERNEL_OK")
</pallas_src>

<mosaic_0001>
module attributes {stable_mosaic.version = 11 : i64} {
  func.func @_skipgram_kernel(%arg0: i32, %arg1: i32, %arg2: memref<32xi32, #tpu.memory_space<smem>>, %arg3: memref<32xi32, #tpu.memory_space<smem>>, %arg4: memref<128xi32, #tpu.memory_space<smem>>, %arg5: memref<512x128xi32, #tpu.memory_space<any>>, %arg6: memref<512x128xi32, #tpu.memory_space<any>>, %arg7: memref<1x1x8x128xf32, #tpu.memory_space<vmem>>, %arg8: memref<2x8x128xi32, #tpu.memory_space<vmem>>, %arg9: memref<2x8x128xi32, #tpu.memory_space<vmem>>, %arg10: memref<2x4x8x128xi32, #tpu.memory_space<vmem>>, %arg11: memref<2x3x!tpu.dma_semaphore, #tpu.memory_space<semaphore_mem>>) attributes {dimension_semantics = [#tpu.dimension_semantics<parallel>, #tpu.dimension_semantics<arbitrary>], iteration_bounds = array<i64: 2, 2>, scalar_prefetch = 3 : i64, scratch_operands = 4 : i64, tpu.core_type = #tpu.core_type<tc>, window_params = [{}, {}, {transform_indices = @transform_2, window_bounds = array<i64: 1, 1, 8, 128>}]} {
    %c2_i32 = arith.constant 2 : i32
    %0 = arith.muli %arg0, %c2_i32 : i32
    %1 = arith.addi %0, %arg1 : i32
    %c2_i32_0 = arith.constant 2 : i32
    %c0_i32 = arith.constant 0 : i32
    %2 = arith.cmpi eq, %c2_i32_0, %c0_i32 : i32
    %c1_i32 = arith.constant 1 : i32
    %3 = arith.select %2, %c1_i32, %c2_i32_0 : i32
    %4 = arith.remsi %arg1, %3 : i32
    %c0_i32_1 = arith.constant 0 : i32
    %5 = arith.cmpi ne, %4, %c0_i32_1 : i32
    %c0_i32_2 = arith.constant 0 : i32
    %6 = arith.cmpi slt, %4, %c0_i32_2 : i32
    %c0_i32_3 = arith.constant 0 : i32
    %7 = arith.cmpi slt, %3, %c0_i32_3 : i32
    %8 = arith.xori %6, %7 : i1
    %9 = arith.andi %8, %5 : i1
    %10 = arith.addi %4, %3 : i32
    %11 = arith.select %9, %10, %4 : i32
    %c0_i32_4 = arith.constant 0 : i32
    %12 = arith.cmpi eq, %arg1, %c0_i32_4 : i32
    %13 = arith.extui %12 : i1 to i32
    %c0_i32_5 = arith.constant 0 : i32
    %14 = arith.cmpi ne, %13, %c0_i32_5 : i32
    scf.if %14 {
      %c8_i32_36 = arith.constant 8 : i32
      %92 = arith.muli %1, %c8_i32_36 : i32
      %c0_i32_37 = arith.constant 0 : i32
      %c8_i32_38 = arith.constant 8 : i32
      %93 = arith.addi %c0_i32_37, %c8_i32_38 : i32
      %c1_i32_39 = arith.constant 1 : i32
      scf.for %arg12 = %c0_i32_37 to %93 step %c1_i32_39  : i32 {
        %94 = arith.addi %92, %arg12 : i32
        %95 = arith.index_cast %94 : i32 to index
        %96 = memref.load %arg2[%95] : memref<32xi32, #tpu.memory_space<smem>>
        %c0_i32_41 = arith.constant 0 : i32
        %c0_i32_42 = arith.constant 0 : i32
        %97 = tpu.memref_slice %arg5[%96, %c0_i32_42] : memref<512x128xi32, #tpu.memory_space<any>> -> memref<1x128xi32, #tpu.memory_space<any>>
        %c0_i32_43 = arith.constant 0 : i32
        %98 = tpu.memref_slice %arg8[%11, %arg12, %c0_i32_43] : memref<2x8x128xi32, #tpu.memory_space<vmem>> -> memref<1x1x128xi32, #tpu.memory_space<vmem>>
        %99 = tpu.memref_squeeze %98 : memref<1x1x128xi32, #tpu.memory_space<vmem>> -> memref<1x128xi32, #tpu.memory_space<vmem>>
        %100 = tpu.memref_slice %arg11[%11, %c0_i32_41] : memref<2x3x!tpu.dma_semaphore, #tpu.memory_space<semaphore_mem>> -> memref<1x1x!tpu.dma_semaphore, #tpu.memory_space<semaphore_mem>>
        %101 = tpu.memref_squeeze %100 : memref<1x1x!tpu.dma_semaphore, #tpu.memory_space<semaphore_mem>> -> memref<!tpu.dma_semaphore, #tpu.memory_space<semaphore_mem>>
        tpu.enqueue_dma source(%97 : memref<1x128xi32, #tpu.memory_space<any>>) target(%99 : memref<1x128xi32, #tpu.memory_space<vmem>>) target_semaphore(%101 : memref<!tpu.dma_semaphore, #tpu.memory_space<semaphore_mem>>)
        %102 = arith.index_cast %94 : i32 to index
        %103 = memref.load %arg3[%102] : memref<32xi32, #tpu.memory_space<smem>>
        %c1_i32_44 = arith.constant 1 : i32
        %c0_i32_45 = arith.constant 0 : i32
        %104 = tpu.memref_slice %arg6[%103, %c0_i32_45] : memref<512x128xi32, #tpu.memory_space<any>> -> memref<1x128xi32, #tpu.memory_space<any>>
        %c0_i32_46 = arith.constant 0 : i32
        %105 = tpu.memref_slice %arg9[%11, %arg12, %c0_i32_46] : memref<2x8x128xi32, #tpu.memory_space<vmem>> -> memref<1x1x128xi32, #tpu.memory_space<vmem>>
        %106 = tpu.memref_squeeze %105 : memref<1x1x128xi32, #tpu.memory_space<vmem>> -> memref<1x128xi32, #tpu.memory_space<vmem>>
        %107 = tpu.memref_slice %arg11[%11, %c1_i32_44] : memref<2x3x!tpu.dma_semaphore, #tpu.memory_space<semaphore_mem>> -> memref<1x1x!tpu.dma_semaphore, #tpu.memory_space<semaphore_mem>>
        %108 = tpu.memref_squeeze %107 : memref<1x1x!tpu.dma_semaphore, #tpu.memory_space<semaphore_mem>> -> memref<!tpu.dma_semaphore, #tpu.memory_space<semaphore_mem>>
        tpu.enqueue_dma source(%104 : memref<1x128xi32, #tpu.memory_space<any>>) target(%106 : memref<1x128xi32, #tpu.memory_space<vmem>>) target_semaphore(%108 : memref<!tpu.dma_semaphore, #tpu.memory_space<semaphore_mem>>)
        %c4_i32 = arith.constant 4 : i32
        %109 = arith.muli %94, %c4_i32 : i32
        %c0_i32_47 = arith.constant 0 : i32
        %110 = arith.addi %109, %c0_i32_47 : i32
        %111 = arith.index_cast %110 : i32 to index
        %112 = memref.load %arg4[%111] : memref<128xi32, #tpu.memory_space<smem>>
        %c0_i32_48 = arith.constant 0 : i32
        %c2_i32_49 = arith.constant 2 : i32
        %c0_i32_50 = arith.constant 0 : i32
        %113 = tpu.memref_slice %arg6[%112, %c0_i32_50] : memref<512x128xi32, #tpu.memory_space<any>> -> memref<1x128xi32, #tpu.memory_space<any>>
        %c0_i32_51 = arith.constant 0 : i32
        %114 = tpu.memref_slice %arg10[%11, %c0_i32_48, %arg12, %c0_i32_51] : memref<2x4x8x128xi32, #tpu.memory_space<vmem>> -> memref<1x1x1x128xi32, #tpu.memory_space<vmem>>
        %115 = tpu.memref_squeeze %114 : memref<1x1x1x128xi32, #tpu.memory_space<vmem>> -> memref<1x128xi32, #tpu.memory_space<vmem>>
        %116 = tpu.memref_slice %arg11[%11, %c2_i32_49] : memref<2x3x!tpu.dma_semaphore, #tpu.memory_space<semaphore_mem>> -> memref<1x1x!tpu.dma_semaphore, #tpu.memory_space<semaphore_mem>>
        %117 = tpu.memref_squeeze %116 : memref<1x1x!tpu.dma_semaphore, #tpu.memory_space<semaphore_mem>> -> memref<!tpu.dma_semaphore, #tpu.memory_space<semaphore_mem>>
        tpu.enqueue_dma source(%113 : memref<1x128xi32, #tpu.memory_space<any>>) target(%115 : memref<1x128xi32, #tpu.memory_space<vmem>>) target_semaphore(%117 : memref<!tpu.dma_semaphore, #tpu.memory_space<semaphore_mem>>)
        %c4_i32_52 = arith.constant 4 : i32
        %118 = arith.muli %94, %c4_i32_52 : i32
        %c1_i32_53 = arith.constant 1 : i32
        %119 = arith.addi %118, %c1_i32_53 : i32
        %120 = arith.index_cast %119 : i32 to index
        %121 = memref.load %arg4[%120] : memref<128xi32, #tpu.memory_space<smem>>
        %c1_i32_54 = arith.constant 1 : i32
        %c2_i32_55 = arith.constant 2 : i32
        %c0_i32_56 = arith.constant 0 : i32
        %122 = tpu.memref_slice %arg6[%121, %c0_i32_56] : memref<512x128xi32, #tpu.memory_space<any>> -> memref<1x128xi32, #tpu.memory_space<any>>
        %c0_i32_57 = arith.constant 0 : i32
        %123 = tpu.memref_slice %arg10[%11, %c1_i32_54, %arg12, %c0_i32_57] : memref<2x4x8x128xi32, #tpu.memory_space<vmem>> -> memref<1x1x1x128xi32, #tpu.memory_space<vmem>>
        %124 = tpu.memref_squeeze %123 : memref<1x1x1x128xi32, #tpu.memory_space<vmem>> -> memref<1x128xi32, #tpu.memory_space<vmem>>
        %125 = tpu.memref_slice %arg11[%11, %c2_i32_55] : memref<2x3x!tpu.dma_semaphore, #tpu.memory_space<semaphore_mem>> -> memref<1x1x!tpu.dma_semaphore, #tpu.memory_space<semaphore_mem>>
        %126 = tpu.memref_squeeze %125 : memref<1x1x!tpu.dma_semaphore, #tpu.memory_space<semaphore_mem>> -> memref<!tpu.dma_semaphore, #tpu.memory_space<semaphore_mem>>
        tpu.enqueue_dma source(%122 : memref<1x128xi32, #tpu.memory_space<any>>) target(%124 : memref<1x128xi32, #tpu.memory_space<vmem>>) target_semaphore(%126 : memref<!tpu.dma_semaphore, #tpu.memory_space<semaphore_mem>>)
        %c4_i32_58 = arith.constant 4 : i32
        %127 = arith.muli %94, %c4_i32_58 : i32
        %c2_i32_59 = arith.constant 2 : i32
        %128 = arith.addi %127, %c2_i32_59 : i32
        %129 = arith.index_cast %128 : i32 to index
        %130 = memref.load %arg4[%129] : memref<128xi32, #tpu.memory_space<smem>>
        %c2_i32_60 = arith.constant 2 : i32
        %c2_i32_61 = arith.constant 2 : i32
        %c0_i32_62 = arith.constant 0 : i32
        %131 = tpu.memref_slice %arg6[%130, %c0_i32_62] : memref<512x128xi32, #tpu.memory_space<any>> -> memref<1x128xi32, #tpu.memory_space<any>>
        %c0_i32_63 = arith.constant 0 : i32
        %132 = tpu.memref_slice %arg10[%11, %c2_i32_60, %arg12, %c0_i32_63] : memref<2x4x8x128xi32, #tpu.memory_space<vmem>> -> memref<1x1x1x128xi32, #tpu.memory_space<vmem>>
        %133 = tpu.memref_squeeze %132 : memref<1x1x1x128xi32, #tpu.memory_space<vmem>> -> memref<1x128xi32, #tpu.memory_space<vmem>>
        %134 = tpu.memref_slice %arg11[%11, %c2_i32_61] : memref<2x3x!tpu.dma_semaphore, #tpu.memory_space<semaphore_mem>> -> memref<1x1x!tpu.dma_semaphore, #tpu.memory_space<semaphore_mem>>
        %135 = tpu.memref_squeeze %134 : memref<1x1x!tpu.dma_semaphore, #tpu.memory_space<semaphore_mem>> -> memref<!tpu.dma_semaphore, #tpu.memory_space<semaphore_mem>>
        tpu.enqueue_dma source(%131 : memref<1x128xi32, #tpu.memory_space<any>>) target(%133 : memref<1x128xi32, #tpu.memory_space<vmem>>) target_semaphore(%135 : memref<!tpu.dma_semaphore, #tpu.memory_space<semaphore_mem>>)
        %c4_i32_64 = arith.constant 4 : i32
        %136 = arith.muli %94, %c4_i32_64 : i32
        %c3_i32 = arith.constant 3 : i32
        %137 = arith.addi %136, %c3_i32 : i32
        %138 = arith.index_cast %137 : i32 to index
        %139 = memref.load %arg4[%138] : memref<128xi32, #tpu.memory_space<smem>>
        %c3_i32_65 = arith.constant 3 : i32
        %c2_i32_66 = arith.constant 2 : i32
        %c0_i32_67 = arith.constant 0 : i32
        %140 = tpu.memref_slice %arg6[%139, %c0_i32_67] : memref<512x128xi32, #tpu.memory_space<any>> -> memref<1x128xi32, #tpu.memory_space<any>>
        %c0_i32_68 = arith.constant 0 : i32
        %141 = tpu.memref_slice %arg10[%11, %c3_i32_65, %arg12, %c0_i32_68] : memref<2x4x8x128xi32, #tpu.memory_space<vmem>> -> memref<1x1x1x128xi32, #tpu.memory_space<vmem>>
        %142 = tpu.memref_squeeze %141 : memref<1x1x1x128xi32, #tpu.memory_space<vmem>> -> memref<1x128xi32, #tpu.memory_space<vmem>>
        %143 = tpu.memref_slice %arg11[%11, %c2_i32_66] : memref<2x3x!tpu.dma_semaphore, #tpu.memory_space<semaphore_mem>> -> memref<1x1x!tpu.dma_semaphore, #tpu.memory_space<semaphore_mem>>
        %144 = tpu.memref_squeeze %143 : memref<1x1x!tpu.dma_semaphore, #tpu.memory_space<semaphore_mem>> -> memref<!tpu.dma_semaphore, #tpu.memory_space<semaphore_mem>>
        tpu.enqueue_dma source(%140 : memref<1x128xi32, #tpu.memory_space<any>>) target(%142 : memref<1x128xi32, #tpu.memory_space<vmem>>) target_semaphore(%144 : memref<!tpu.dma_semaphore, #tpu.memory_space<semaphore_mem>>)
      }
      %c8_i32_40 = arith.constant 8 : i32
    } else {
    }
    %c1_i32_6 = arith.constant 1 : i32
    %15 = arith.addi %arg1, %c1_i32_6 : i32
    %c2_i32_7 = arith.constant 2 : i32
    %16 = arith.cmpi slt, %15, %c2_i32_7 : i32
    %17 = arith.extui %16 : i1 to i32
    %c0_i32_8 = arith.constant 0 : i32
    %18 = arith.cmpi ne, %17, %c0_i32_8 : i32
    scf.if %18 {
      %c1_i32_36 = arith.constant 1 : i32
      %92 = arith.addi %1, %c1_i32_36 : i32
      %c1_i32_37 = arith.constant 1 : i32
      %93 = arith.subi %c1_i32_37, %11 : i32
      %c8_i32_38 = arith.constant 8 : i32
      %94 = arith.muli %92, %c8_i32_38 : i32
      %c0_i32_39 = arith.constant 0 : i32
      %c8_i32_40 = arith.constant 8 : i32
      %95 = arith.addi %c0_i32_39, %c8_i32_40 : i32
      %c1_i32_41 = arith.constant 1 : i32
      scf.for %arg12 = %c0_i32_39 to %95 step %c1_i32_41  : i32 {
        %96 = arith.addi %94, %arg12 : i32
        %97 = arith.index_cast %96 : i32 to index
        %98 = memref.load %arg2[%97] : memref<32xi32, #tpu.memory_space<smem>>
        %c0_i32_43 = arith.constant 0 : i32
        %c0_i32_44 = arith.constant 0 : i32
        %99 = tpu.memref_slice %arg5[%98, %c0_i32_44] : memref<512x128xi32, #tpu.memory_space<any>> -> memref<1x128xi32, #tpu.memory_space<any>>
        %c0_i32_45 = arith.constant 0 : i32
        %100 = tpu.memref_slice %arg8[%93, %arg12, %c0_i32_45] : memref<2x8x128xi32, #tpu.memory_space<vmem>> -> memref<1x1x128xi32, #tpu.memory_space<vmem>>
        %101 = tpu.memref_squeeze %100 : memref<1x1x128xi32, #tpu.memory_space<vmem>> -> memref<1x128xi32, #tpu.memory_space<vmem>>
        %102 = tpu.memref_slice %arg11[%93, %c0_i32_43] : memref<2x3x!tpu.dma_semaphore, #tpu.memory_space<semaphore_mem>> -> memref<1x1x!tpu.dma_semaphore, #tpu.memory_space<semaphore_mem>>
        %103 = tpu.memref_squeeze %102 : memref<1x1x!tpu.dma_semaphore, #tpu.memory_space<semaphore_mem>> -> memref<!tpu.dma_semaphore, #tpu.memory_space<semaphore_mem>>
        tpu.enqueue_dma source(%99 : memref<1x128xi32, #tpu.memory_space<any>>) target(%101 : memref<1x128xi32, #tpu.memory_space<vmem>>) target_semaphore(%103 : memref<!tpu.dma_semaphore, #tpu.memory_space<semaphore_mem>>)
        %104 = arith.index_cast %96 : i32 to index
        %105 = memref.load %arg3[%104] : memref<32xi32, #tpu.memory_space<smem>>
        %c1_i32_46 = arith.constant 1 : i32
        %c0_i32_47 = arith.constant 0 : i32
        %106 = tpu.memref_slice %arg6[%105, %c0_i32_47] : memref<512x128xi32, #tpu.memory_space<any>> -> memref<1x128xi32, #tpu.memory_space<any>>
        %c0_i32_48 = arith.constant 0 : i32
        %107 = tpu.memref_slice %arg9[%93, %arg12, %c0_i32_48] : memref<2x8x128xi32, #tpu.memory_space<vmem>> -> memref<1x1x128xi32, #tpu.memory_space<vmem>>
        %108 = tpu.memref_squeeze %107 : memref<1x1x128xi32, #tpu.memory_space<vmem>> -> memref<1x128xi32, #tpu.memory_space<vmem>>
        %109 = tpu.memref_slice %arg11[%93, %c1_i32_46] : memref<2x3x!tpu.dma_semaphore, #tpu.memory_space<semaphore_mem>> -> memref<1x1x!tpu.dma_semaphore, #tpu.memory_space<semaphore_mem>>
        %110 = tpu.memref_squeeze %109 : memref<1x1x!tpu.dma_semaphore, #tpu.memory_space<semaphore_mem>> -> memref<!tpu.dma_semaphore, #tpu.memory_space<semaphore_mem>>
        tpu.enqueue_dma source(%106 : memref<1x128xi32, #tpu.memory_space<any>>) target(%108 : memref<1x128xi32, #tpu.memory_space<vmem>>) target_semaphore(%110 : memref<!tpu.dma_semaphore, #tpu.memory_space<semaphore_mem>>)
        %c4_i32 = arith.constant 4 : i32
        %111 = arith.muli %96, %c4_i32 : i32
        %c0_i32_49 = arith.constant 0 : i32
        %112 = arith.addi %111, %c0_i32_49 : i32
        %113 = arith.index_cast %112 : i32 to index
        %114 = memref.load %arg4[%113] : memref<128xi32, #tpu.memory_space<smem>>
        %c0_i32_50 = arith.constant 0 : i32
        %c2_i32_51 = arith.constant 2 : i32
        %c0_i32_52 = arith.constant 0 : i32
        %115 = tpu.memref_slice %arg6[%114, %c0_i32_52] : memref<512x128xi32, #tpu.memory_space<any>> -> memref<1x128xi32, #tpu.memory_space<any>>
        %c0_i32_53 = arith.constant 0 : i32
        %116 = tpu.memref_slice %arg10[%93, %c0_i32_50, %arg12, %c0_i32_53] : memref<2x4x8x128xi32, #tpu.memory_space<vmem>> -> memref<1x1x1x128xi32, #tpu.memory_space<vmem>>
        %117 = tpu.memref_squeeze %116 : memref<1x1x1x128xi32, #tpu.memory_space<vmem>> -> memref<1x128xi32, #tpu.memory_space<vmem>>
        %118 = tpu.memref_slice %arg11[%93, %c2_i32_51] : memref<2x3x!tpu.dma_semaphore, #tpu.memory_space<semaphore_mem>> -> memref<1x1x!tpu.dma_semaphore, #tpu.memory_space<semaphore_mem>>
        %119 = tpu.memref_squeeze %118 : memref<1x1x!tpu.dma_semaphore, #tpu.memory_space<semaphore_mem>> -> memref<!tpu.dma_semaphore, #tpu.memory_space<semaphore_mem>>
        tpu.enqueue_dma source(%115 : memref<1x128xi32, #tpu.memory_space<any>>) target(%117 : memref<1x128xi32, #tpu.memory_space<vmem>>) target_semaphore(%119 : memref<!tpu.dma_semaphore, #tpu.memory_space<semaphore_mem>>)
        %c4_i32_54 = arith.constant 4 : i32
        %120 = arith.muli %96, %c4_i32_54 : i32
        %c1_i32_55 = arith.constant 1 : i32
        %121 = arith.addi %120, %c1_i32_55 : i32
        %122 = arith.index_cast %121 : i32 to index
        %123 = memref.load %arg4[%122] : memref<128xi32, #tpu.memory_space<smem>>
        %c1_i32_56 = arith.constant 1 : i32
        %c2_i32_57 = arith.constant 2 : i32
        %c0_i32_58 = arith.constant 0 : i32
        %124 = tpu.memref_slice %arg6[%123, %c0_i32_58] : memref<512x128xi32, #tpu.memory_space<any>> -> memref<1x128xi32, #tpu.memory_space<any>>
        %c0_i32_59 = arith.constant 0 : i32
        %125 = tpu.memref_slice %arg10[%93, %c1_i32_56, %arg12, %c0_i32_59] : memref<2x4x8x128xi32, #tpu.memory_space<vmem>> -> memref<1x1x1x128xi32, #tpu.memory_space<vmem>>
        %126 = tpu.memref_squeeze %125 : memref<1x1x1x128xi32, #tpu.memory_space<vmem>> -> memref<1x128xi32, #tpu.memory_space<vmem>>
        %127 = tpu.memref_slice %arg11[%93, %c2_i32_57] : memref<2x3x!tpu.dma_semaphore, #tpu.memory_space<semaphore_mem>> -> memref<1x1x!tpu.dma_semaphore, #tpu.memory_space<semaphore_mem>>
        %128 = tpu.memref_squeeze %127 : memref<1x1x!tpu.dma_semaphore, #tpu.memory_space<semaphore_mem>> -> memref<!tpu.dma_semaphore, #tpu.memory_space<semaphore_mem>>
        tpu.enqueue_dma source(%124 : memref<1x128xi32, #tpu.memory_space<any>>) target(%126 : memref<1x128xi32, #tpu.memory_space<vmem>>) target_semaphore(%128 : memref<!tpu.dma_semaphore, #tpu.memory_space<semaphore_mem>>)
        %c4_i32_60 = arith.constant 4 : i32
        %129 = arith.muli %96, %c4_i32_60 : i32
        %c2_i32_61 = arith.constant 2 : i32
        %130 = arith.addi %129, %c2_i32_61 : i32
        %131 = arith.index_cast %130 : i32 to index
        %132 = memref.load %arg4[%131] : memref<128xi32, #tpu.memory_space<smem>>
        %c2_i32_62 = arith.constant 2 : i32
        %c2_i32_63 = arith.constant 2 : i32
        %c0_i32_64 = arith.constant 0 : i32
        %133 = tpu.memref_slice %arg6[%132, %c0_i32_64] : memref<512x128xi32, #tpu.memory_space<any>> -> memref<1x128xi32, #tpu.memory_space<any>>
        %c0_i32_65 = arith.constant 0 : i32
        %134 = tpu.memref_slice %arg10[%93, %c2_i32_62, %arg12, %c0_i32_65] : memref<2x4x8x128xi32, #tpu.memory_space<vmem>> -> memref<1x1x1x128xi32, #tpu.memory_space<vmem>>
        %135 = tpu.memref_squeeze %134 : memref<1x1x1x128xi32, #tpu.memory_space<vmem>> -> memref<1x128xi32, #tpu.memory_space<vmem>>
        %136 = tpu.memref_slice %arg11[%93, %c2_i32_63] : memref<2x3x!tpu.dma_semaphore, #tpu.memory_space<semaphore_mem>> -> memref<1x1x!tpu.dma_semaphore, #tpu.memory_space<semaphore_mem>>
        %137 = tpu.memref_squeeze %136 : memref<1x1x!tpu.dma_semaphore, #tpu.memory_space<semaphore_mem>> -> memref<!tpu.dma_semaphore, #tpu.memory_space<semaphore_mem>>
        tpu.enqueue_dma source(%133 : memref<1x128xi32, #tpu.memory_space<any>>) target(%135 : memref<1x128xi32, #tpu.memory_space<vmem>>) target_semaphore(%137 : memref<!tpu.dma_semaphore, #tpu.memory_space<semaphore_mem>>)
        %c4_i32_66 = arith.constant 4 : i32
        %138 = arith.muli %96, %c4_i32_66 : i32
        %c3_i32 = arith.constant 3 : i32
        %139 = arith.addi %138, %c3_i32 : i32
        %140 = arith.index_cast %139 : i32 to index
        %141 = memref.load %arg4[%140] : memref<128xi32, #tpu.memory_space<smem>>
        %c3_i32_67 = arith.constant 3 : i32
        %c2_i32_68 = arith.constant 2 : i32
        %c0_i32_69 = arith.constant 0 : i32
        %142 = tpu.memref_slice %arg6[%141, %c0_i32_69] : memref<512x128xi32, #tpu.memory_space<any>> -> memref<1x128xi32, #tpu.memory_space<any>>
        %c0_i32_70 = arith.constant 0 : i32
        %143 = tpu.memref_slice %arg10[%93, %c3_i32_67, %arg12, %c0_i32_70] : memref<2x4x8x128xi32, #tpu.memory_space<vmem>> -> memref<1x1x1x128xi32, #tpu.memory_space<vmem>>
        %144 = tpu.memref_squeeze %143 : memref<1x1x1x128xi32, #tpu.memory_space<vmem>> -> memref<1x128xi32, #tpu.memory_space<vmem>>
        %145 = tpu.memref_slice %arg11[%93, %c2_i32_68] : memref<2x3x!tpu.dma_semaphore, #tpu.memory_space<semaphore_mem>> -> memref<1x1x!tpu.dma_semaphore, #tpu.memory_space<semaphore_mem>>
        %146 = tpu.memref_squeeze %145 : memref<1x1x!tpu.dma_semaphore, #tpu.memory_space<semaphore_mem>> -> memref<!tpu.dma_semaphore, #tpu.memory_space<semaphore_mem>>
        tpu.enqueue_dma source(%142 : memref<1x128xi32, #tpu.memory_space<any>>) target(%144 : memref<1x128xi32, #tpu.memory_space<vmem>>) target_semaphore(%146 : memref<!tpu.dma_semaphore, #tpu.memory_space<semaphore_mem>>)
      }
      %c8_i32_42 = arith.constant 8 : i32
    } else {
    }
    %c0_i32_9 = arith.constant 0 : i32
    %c8_i32 = arith.constant 8 : i32
    %19 = arith.addi %c0_i32_9, %c8_i32 : i32
    %c1_i32_10 = arith.constant 1 : i32
    scf.for %arg12 = %c0_i32_9 to %19 step %c1_i32_10  : i32 {
      %c0_i32_36 = arith.constant 0 : i32
      %c0_i32_37 = arith.constant 0 : i32
      %c0_i32_38 = arith.constant 0 : i32
      %92 = tpu.memref_slice %arg5[%c0_i32_37, %c0_i32_38] : memref<512x128xi32, #tpu.memory_space<any>> -> memref<1x128xi32, #tpu.memory_space<any>>
      %c0_i32_39 = arith.constant 0 : i32
      %c0_i32_40 = arith.constant 0 : i32
      %93 = tpu.memref_slice %arg8[%11, %c0_i32_39, %c0_i32_40] : memref<2x8x128xi32, #tpu.memory_space<vmem>> -> memref<1x1x128xi32, #tpu.memory_space<vmem>>
      %94 = tpu.memref_squeeze %93 : memref<1x1x128xi32, #tpu.memory_space<vmem>> -> memref<1x128xi32, #tpu.memory_space<vmem>>
      %95 = tpu.memref_slice %arg11[%11, %c0_i32_36] : memref<2x3x!tpu.dma_semaphore, #tpu.memory_space<semaphore_mem>> -> memref<1x1x!tpu.dma_semaphore, #tpu.memory_space<semaphore_mem>>
      %96 = tpu.memref_squeeze %95 : memref<1x1x!tpu.dma_semaphore, #tpu.memory_space<semaphore_mem>> -> memref<!tpu.dma_semaphore, #tpu.memory_space<semaphore_mem>>
      tpu.wait_dma2 semaphore(%96 : memref<!tpu.dma_semaphore, #tpu.memory_space<semaphore_mem>>) src(%92 : memref<1x128xi32, #tpu.memory_space<any>>) dst(%94 : memref<1x128xi32, #tpu.memory_space<vmem>>)
      %c1_i32_41 = arith.constant 1 : i32
      %c0_i32_42 = arith.constant 0 : i32
      %c0_i32_43 = arith.constant 0 : i32
      %97 = tpu.memref_slice %arg6[%c0_i32_42, %c0_i32_43] : memref<512x128xi32, #tpu.memory_space<any>> -> memref<1x128xi32, #tpu.memory_space<any>>
      %c0_i32_44 = arith.constant 0 : i32
      %c0_i32_45 = arith.constant 0 : i32
      %98 = tpu.memref_slice %arg9[%11, %c0_i32_44, %c0_i32_45] : memref<2x8x128xi32, #tpu.memory_space<vmem>> -> memref<1x1x128xi32, #tpu.memory_space<vmem>>
      %99 = tpu.memref_squeeze %98 : memref<1x1x128xi32, #tpu.memory_space<vmem>> -> memref<1x128xi32, #tpu.memory_space<vmem>>
      %100 = tpu.memref_slice %arg11[%11, %c1_i32_41] : memref<2x3x!tpu.dma_semaphore, #tpu.memory_space<semaphore_mem>> -> memref<1x1x!tpu.dma_semaphore, #tpu.memory_space<semaphore_mem>>
      %101 = tpu.memref_squeeze %100 : memref<1x1x!tpu.dma_semaphore, #tpu.memory_space<semaphore_mem>> -> memref<!tpu.dma_semaphore, #tpu.memory_space<semaphore_mem>>
      tpu.wait_dma2 semaphore(%101 : memref<!tpu.dma_semaphore, #tpu.memory_space<semaphore_mem>>) src(%97 : memref<1x128xi32, #tpu.memory_space<any>>) dst(%99 : memref<1x128xi32, #tpu.memory_space<vmem>>)
      %c0_i32_46 = arith.constant 0 : i32
      %c2_i32_47 = arith.constant 2 : i32
      %c0_i32_48 = arith.constant 0 : i32
      %c0_i32_49 = arith.constant 0 : i32
      %102 = tpu.memref_slice %arg6[%c0_i32_48, %c0_i32_49] : memref<512x128xi32, #tpu.memory_space<any>> -> memref<1x128xi32, #tpu.memory_space<any>>
      %c0_i32_50 = arith.constant 0 : i32
      %c0_i32_51 = arith.constant 0 : i32
      %103 = tpu.memref_slice %arg10[%11, %c0_i32_46, %c0_i32_50, %c0_i32_51] : memref<2x4x8x128xi32, #tpu.memory_space<vmem>> -> memref<1x1x1x128xi32, #tpu.memory_space<vmem>>
      %104 = tpu.memref_squeeze %103 : memref<1x1x1x128xi32, #tpu.memory_space<vmem>> -> memref<1x128xi32, #tpu.memory_space<vmem>>
      %105 = tpu.memref_slice %arg11[%11, %c2_i32_47] : memref<2x3x!tpu.dma_semaphore, #tpu.memory_space<semaphore_mem>> -> memref<1x1x!tpu.dma_semaphore, #tpu.memory_space<semaphore_mem>>
      %106 = tpu.memref_squeeze %105 : memref<1x1x!tpu.dma_semaphore, #tpu.memory_space<semaphore_mem>> -> memref<!tpu.dma_semaphore, #tpu.memory_space<semaphore_mem>>
      tpu.wait_dma2 semaphore(%106 : memref<!tpu.dma_semaphore, #tpu.memory_space<semaphore_mem>>) src(%102 : memref<1x128xi32, #tpu.memory_space<any>>) dst(%104 : memref<1x128xi32, #tpu.memory_space<vmem>>)
      %c0_i32_52 = arith.constant 0 : i32
      %c2_i32_53 = arith.constant 2 : i32
      %c0_i32_54 = arith.constant 0 : i32
      %c0_i32_55 = arith.constant 0 : i32
      %107 = tpu.memref_slice %arg6[%c0_i32_54, %c0_i32_55] : memref<512x128xi32, #tpu.memory_space<any>> -> memref<1x128xi32, #tpu.memory_space<any>>
      %c0_i32_56 = arith.constant 0 : i32
      %c0_i32_57 = arith.constant 0 : i32
      %108 = tpu.memref_slice %arg10[%11, %c0_i32_52, %c0_i32_56, %c0_i32_57] : memref<2x4x8x128xi32, #tpu.memory_space<vmem>> -> memref<1x1x1x128xi32, #tpu.memory_space<vmem>>
      %109 = tpu.memref_squeeze %108 : memref<1x1x1x128xi32, #tpu.memory_space<vmem>> -> memref<1x128xi32, #tpu.memory_space<vmem>>
      %110 = tpu.memref_slice %arg11[%11, %c2_i32_53] : memref<2x3x!tpu.dma_semaphore, #tpu.memory_space<semaphore_mem>> -> memref<1x1x!tpu.dma_semaphore, #tpu.memory_space<semaphore_mem>>
      %111 = tpu.memref_squeeze %110 : memref<1x1x!tpu.dma_semaphore, #tpu.memory_space<semaphore_mem>> -> memref<!tpu.dma_semaphore, #tpu.memory_space<semaphore_mem>>
      tpu.wait_dma2 semaphore(%111 : memref<!tpu.dma_semaphore, #tpu.memory_space<semaphore_mem>>) src(%107 : memref<1x128xi32, #tpu.memory_space<any>>) dst(%109 : memref<1x128xi32, #tpu.memory_space<vmem>>)
      %c0_i32_58 = arith.constant 0 : i32
      %c2_i32_59 = arith.constant 2 : i32
      %c0_i32_60 = arith.constant 0 : i32
      %c0_i32_61 = arith.constant 0 : i32
      %112 = tpu.memref_slice %arg6[%c0_i32_60, %c0_i32_61] : memref<512x128xi32, #tpu.memory_space<any>> -> memref<1x128xi32, #tpu.memory_space<any>>
      %c0_i32_62 = arith.constant 0 : i32
      %c0_i32_63 = arith.constant 0 : i32
      %113 = tpu.memref_slice %arg10[%11, %c0_i32_58, %c0_i32_62, %c0_i32_63] : memref<2x4x8x128xi32, #tpu.memory_space<vmem>> -> memref<1x1x1x128xi32, #tpu.memory_space<vmem>>
      %114 = tpu.memref_squeeze %113 : memref<1x1x1x128xi32, #tpu.memory_space<vmem>> -> memref<1x128xi32, #tpu.memory_space<vmem>>
      %115 = tpu.memref_slice %arg11[%11, %c2_i32_59] : memref<2x3x!tpu.dma_semaphore, #tpu.memory_space<semaphore_mem>> -> memref<1x1x!tpu.dma_semaphore, #tpu.memory_space<semaphore_mem>>
      %116 = tpu.memref_squeeze %115 : memref<1x1x!tpu.dma_semaphore, #tpu.memory_space<semaphore_mem>> -> memref<!tpu.dma_semaphore, #tpu.memory_space<semaphore_mem>>
      tpu.wait_dma2 semaphore(%116 : memref<!tpu.dma_semaphore, #tpu.memory_space<semaphore_mem>>) src(%112 : memref<1x128xi32, #tpu.memory_space<any>>) dst(%114 : memref<1x128xi32, #tpu.memory_space<vmem>>)
      %c0_i32_64 = arith.constant 0 : i32
      %c2_i32_65 = arith.constant 2 : i32
      %c0_i32_66 = arith.constant 0 : i32
      %c0_i32_67 = arith.constant 0 : i32
      %117 = tpu.memref_slice %arg6[%c0_i32_66, %c0_i32_67] : memref<512x128xi32, #tpu.memory_space<any>> -> memref<1x128xi32, #tpu.memory_space<any>>
      %c0_i32_68 = arith.constant 0 : i32
      %c0_i32_69 = arith.constant 0 : i32
      %118 = tpu.memref_slice %arg10[%11, %c0_i32_64, %c0_i32_68, %c0_i32_69] : memref<2x4x8x128xi32, #tpu.memory_space<vmem>> -> memref<1x1x1x128xi32, #tpu.memory_space<vmem>>
      %119 = tpu.memref_squeeze %118 : memref<1x1x1x128xi32, #tpu.memory_space<vmem>> -> memref<1x128xi32, #tpu.memory_space<vmem>>
      %120 = tpu.memref_slice %arg11[%11, %c2_i32_65] : memref<2x3x!tpu.dma_semaphore, #tpu.memory_space<semaphore_mem>> -> memref<1x1x!tpu.dma_semaphore, #tpu.memory_space<semaphore_mem>>
      %121 = tpu.memref_squeeze %120 : memref<1x1x!tpu.dma_semaphore, #tpu.memory_space<semaphore_mem>> -> memref<!tpu.dma_semaphore, #tpu.memory_space<semaphore_mem>>
      tpu.wait_dma2 semaphore(%121 : memref<!tpu.dma_semaphore, #tpu.memory_space<semaphore_mem>>) src(%117 : memref<1x128xi32, #tpu.memory_space<any>>) dst(%119 : memref<1x128xi32, #tpu.memory_space<vmem>>)
    }
    %20 = arith.index_cast %11 : i32 to index
    %c0 = arith.constant 0 : index
    %c0_11 = arith.constant 0 : index
    %21 = vector.load %arg8[%20, %c0, %c0_11] : memref<2x8x128xi32, #tpu.memory_space<vmem>>, vector<1x8x128xi32>
    %22 = vector.shape_cast %21 : vector<1x8x128xi32> to vector<8x128xi32>
    %c16_i32 = arith.constant 16 : i32
    %23 = vector.broadcast %c16_i32 : i32 to vector<8x128xi32>
    %24 = arith.shli %22, %23 : vector<8x128xi32>
    %25 = tpu.bitcast %24 : vector<8x128xi32> -> vector<8x128xf32>
    %c-65536_i32 = arith.constant -65536 : i32
    %26 = vector.broadcast %c-65536_i32 : i32 to vector<8x128xi32>
    %27 = arith.andi %22, %26 : vector<8x128xi32>
    %28 = tpu.bitcast %27 : vector<8x128xi32> -> vector<8x128xf32>
    %29 = arith.index_cast %11 : i32 to index
    %c0_12 = arith.constant 0 : index
    %c0_13 = arith.constant 0 : index
    %30 = vector.load %arg9[%29, %c0_12, %c0_13] : memref<2x8x128xi32, #tpu.memory_space<vmem>>, vector<1x8x128xi32>
    %31 = vector.shape_cast %30 : vector<1x8x128xi32> to vector<8x128xi32>
    %c16_i32_14 = arith.constant 16 : i32
    %32 = vector.broadcast %c16_i32_14 : i32 to vector<8x128xi32>
    %33 = arith.shli %31, %32 : vector<8x128xi32>
    %34 = tpu.bitcast %33 : vector<8x128xi32> -> vector<8x128xf32>
    %c-65536_i32_15 = arith.constant -65536 : i32
    %35 = vector.broadcast %c-65536_i32_15 : i32 to vector<8x128xi32>
    %36 = arith.andi %31, %35 : vector<8x128xi32>
    %37 = tpu.bitcast %36 : vector<8x128xi32> -> vector<8x128xf32>
    %38 = arith.index_cast %11 : i32 to index
    %c0_16 = arith.constant 0 : index
    %c0_17 = arith.constant 0 : index
    %c0_18 = arith.constant 0 : index
    %39 = vector.load %arg10[%38, %c0_16, %c0_17, %c0_18] : memref<2x4x8x128xi32, #tpu.memory_space<vmem>>, vector<1x4x8x128xi32>
    %40 = vector.shape_cast %39 : vector<1x4x8x128xi32> to vector<4x8x128xi32>
    %c16_i32_19 = arith.constant 16 : i32
    %41 = vector.broadcast %c16_i32_19 : i32 to vector<4x8x128xi32>
    %42 = arith.shli %40, %41 : vector<4x8x128xi32>
    %43 = tpu.bitcast %42 : vector<4x8x128xi32> -> vector<4x8x128xf32>
    %c-65536_i32_20 = arith.constant -65536 : i32
    %44 = vector.broadcast %c-65536_i32_20 : i32 to vector<4x8x128xi32>
    %45 = arith.andi %40, %44 : vector<4x8x128xi32>
    %46 = tpu.bitcast %45 : vector<4x8x128xi32> -> vector<4x8x128xf32>
    %cst = arith.constant dense<0.000000e+00> : vector<8x128xf32>
    %47 = vector.multi_reduction <add>, %43, %cst [0] : vector<4x8x128xf32> to vector<8x128xf32>
    %cst_21 = arith.constant dense<0.000000e+00> : vector<8x128xf32>
    %48 = vector.multi_reduction <add>, %46, %cst_21 [0] : vector<4x8x128xf32> to vector<8x128xf32>
    %49 = arith.mulf %25, %34 : vector<8x128xf32>
    %50 = arith.mulf %28, %37 : vector<8x128xf32>
    %51 = arith.addf %49, %50 : vector<8x128xf32>
    %cst_22 = arith.constant dense<0.000000e+00> : vector<8xf32>
    %52 = vector.multi_reduction <add>, %51, %cst_22 [1] : vector<8x128xf32> to vector<8xf32>
    %53 = vector.shape_cast %52 : vector<8xf32> to vector<8x1xf32>
    %54 = arith.mulf %25, %47 : vector<8x128xf32>
    %55 = arith.mulf %28, %48 : vector<8x128xf32>
    %56 = arith.addf %54, %55 : vector<8x128xf32>
    %cst_23 = arith.constant dense<0.000000e+00> : vector<8xf32>
    %57 = vector.multi_reduction <add>, %56, %cst_23 [1] : vector<8x128xf32> to vector<8xf32>
    %58 = vector.shape_cast %57 : vector<8xf32> to vector<8x1xf32>
    %cst_24 = arith.constant 0.000000e+00 : f32
    %59 = vector.broadcast %cst_24 : f32 to vector<8x1xf32>
    %60 = arith.minimumf %53, %59 : vector<8x1xf32>
    %61 = math.absf %53 : vector<8x1xf32>
    %cst_25 = arith.constant 0.000000e+00 : f32
    %62 = vector.broadcast %cst_25 : f32 to vector<8x1xf32>
    %63 = arith.subf %62, %61 : vector<8x1xf32>
    %64 = math.exp %63 : vector<8x1xf32>
    %65 = math.log1p %64 : vector<8x1xf32>
    %66 = arith.subf %60, %65 : vector<8x1xf32>
    %cst_26 = arith.constant 0.000000e+00 : f32
    %67 = vector.broadcast %cst_26 : f32 to vector<8x1xf32>
    %68 = arith.subf %67, %58 : vector<8x1xf32>
    %cst_27 = arith.constant 0.000000e+00 : f32
    %69 = vector.broadcast %cst_27 : f32 to vector<8x1xf32>
    %70 = arith.minimumf %68, %69 : vector<8x1xf32>
    %71 = math.absf %68 : vector<8x1xf32>
    %cst_28 = arith.constant 0.000000e+00 : f32
    %72 = vector.broadcast %cst_28 : f32 to vector<8x1xf32>
    %73 = arith.subf %72, %71 : vector<8x1xf32>
    %74 = math.exp %73 : vector<8x1xf32>
    %75 = math.log1p %74 : vector<8x1xf32>
    %76 = arith.subf %70, %75 : vector<8x1xf32>
    %77 = arith.addf %66, %76 : vector<8x1xf32>
    %c8_i32_29 = arith.constant 8 : i32
    %78 = arith.muli %1, %c8_i32_29 : i32
    %79 = tpu.iota {dimensions = array<i32: 0>} : vector<8x1xi32>
    %80 = vector.broadcast %78 : i32 to vector<8x1xi32>
    %81 = arith.addi %80, %79 : vector<8x1xi32>
    %c30_i32 = arith.constant 30 : i32
    %82 = vector.broadcast %c30_i32 : i32 to vector<8x1xi32>
    %83 = arith.cmpi slt, %81, %82 : vector<8x1xi32>
    %cst_30 = arith.constant 0.000000e+00 : f32
    %84 = vector.broadcast %cst_30 : f32 to vector<8x1xf32>
    %85 = arith.select %83, %77, %84 : vector<8x1xi1>, vector<8x1xf32>
    %86 = vector.shape_cast %85 : vector<8x1xf32> to vector<1x8x1xf32>
    %cst_31 = arith.constant dense<0.000000e+00> : vector<1xf32>
    %87 = vector.multi_reduction <add>, %86, %cst_31 [1, 2] : vector<1x8x1xf32> to vector<1xf32>
    %88 = vector.shape_cast %87 : vector<1xf32> to vector<1x1x1xf32>
    %89 = vector.extract %88[0, 0, 0] : f32 from vector<1x1x1xf32>
    %90 = vector.broadcast %89 : f32 to vector<1x1x8x128xf32>
    %c0_32 = arith.constant 0 : index
    %c0_33 = arith.constant 0 : index
    %c0_34 = arith.constant 0 : index
    %c0_35 = arith.constant 0 : index
    %91 = vector.load %arg7[%c0_32, %c0_33, %c0_34, %c0_35] : memref<1x1x8x128xf32, #tpu.memory_space<vmem>>, vector<1x1x8x128xf32>
    tpu.vector_store %arg7[%c0_32, %c0_33, %c0_34, %c0_35], %90 {strides = array<i32>} : memref<1x1x8x128xf32, #tpu.memory_space<vmem>>, vector<1x1x8x128xf32>,
    return
  }
  func.func @transform_2(%arg0: i32, %arg1: i32, %arg2: memref<32xi32, #tpu.memory_space<smem>>, %arg3: memref<32xi32, #tpu.memory_space<smem>>, %arg4: memref<128xi32, #tpu.memory_space<smem>>) -> (i32, i32, i32, i32) {
    %c0_i32 = arith.constant 0 : i32
    %c0_i32_0 = arith.constant 0 : i32
    %c0_i32_1 = arith.constant 0 : i32
    return %arg0, %arg1, %c0_i32, %c0_i32_0 : i32, i32, i32, i32
  }
}

</mosaic_0001>

<llo_original>
// kernel: tpu_custom_call.1
$region0: #{tpu_custom_call.1}
  #allocation0 [shape = 'u32[]', space=smem, size = 0x4, offset = 0x4, fixed_abs, tag = 'smem constant byte address 0x4 - core index']
  #allocation1 [shape = 'u32[144,128]{1,0:T(1,128)}', space=vmem, size = 0x12000, scoped, tag = 'internal scratch']
  #allocation2 [shape = 's32[2,8,128]{2,1,0:T(8,128)}', space=vmem, size = 0x2000, scoped, tag = 'scratch operand']
  #allocation3 [shape = 's32[2,8,128]{2,1,0:T(8,128)}', space=vmem, size = 0x2000, scoped, tag = 'scratch operand']
  #allocation4 [shape = 's32[2,4,8,128]{3,2,1,0:T(8,128)}', space=vmem, size = 0x8000, scoped, tag = 'scratch operand']
  #allocation5 [shape = 's32[6]{0}', space=sflag, size = 0x18, scoped, tag = 'scratch operand']
  #allocation6 [shape = 's32[1]{0}', space=sflag, size = 0x4, scoped, tag = 'scoped memory for tpu_custom_call.1']
  #allocation7 [shape = 'u8[512]{0}', space=smem, size = 0x200, scoped, tag = 'prefetched SMEM operand 0']
  #allocation8 [shape = 'u8[512]{0}', space=smem, size = 0x200, scoped, tag = 'prefetched SMEM operand 1']
  #allocation9 [shape = 'u8[512]{0}', space=smem, size = 0x200, scoped, tag = 'prefetched SMEM operand 2']
  #allocation12 [shape = 's32[]', space=sflag, size = 0x4, offset = 0, fixed_abs, tag = 'sflag constant byte address 0x0 - dummy sync flag']
  #allocation13 [shape = 's32[]', space=sflag, size = 0x4, offset = 0, fixed_abs, tag = 'sflag constant byte address 0x0 - dummy sync flag']
  #allocation14 [shape = 'u32[]', space=smem, size = 0x4, offset = 0x44, fixed_abs, tag = 'smem constant byte address 0x44 - assertion arg 0']
  #allocation15 [shape = 'u32[]', space=smem, size = 0x4, offset = 0x48, fixed_abs, tag = 'smem constant byte address 0x48 - assertion arg 1']
  #allocation16 [shape = 's32[]', space=sflag, size = 0x4, offset = 0, fixed_abs, tag = 'sflag constant byte address 0x0 - dummy sync flag']
  #allocation17 [shape = 's32[]', space=sflag, size = 0x4, offset = 0, fixed_abs, tag = 'sflag constant byte address 0x0 - dummy sync flag']
  #allocation18 [shape = 's32[]', space=sflag, size = 0x4, offset = 0, fixed_abs, tag = 'sflag constant byte address 0x0 - dummy sync flag']
  #allocation19 [shape = 's32[]', space=sflag, size = 0x4, offset = 0, fixed_abs, tag = 'sflag constant byte address 0x0 - dummy sync flag']
  #allocation20 [shape = 's32[]', space=sflag, size = 0x4, offset = 0, fixed_abs, tag = 'sflag constant byte address 0x0 - dummy sync flag']
  #allocation21 [shape = 's32[]', space=sflag, size = 0x4, offset = 0, fixed_abs, tag = 'sflag constant byte address 0x0 - dummy sync flag']
  #allocation22 [shape = 's32[]', space=sflag, size = 0x4, offset = 0, fixed_abs, tag = 'sflag constant byte address 0x0 - dummy sync flag']
  #allocation23 [shape = 's32[]', space=sflag, size = 0x4, offset = 0, fixed_abs, tag = 'sflag constant byte address 0x0 - dummy sync flag']
  #allocation24 [shape = 's32[]', space=sflag, size = 0x4, offset = 0, fixed_abs, tag = 'sflag constant byte address 0x0 - dummy sync flag']
  #allocation25 [shape = 's32[]', space=sflag, size = 0x4, offset = 0, fixed_abs, tag = 'sflag constant byte address 0x0 - dummy sync flag']
  #allocation26 [shape = 's32[]', space=sflag, size = 0x4, offset = 0, fixed_abs, tag = 'sflag constant byte address 0x0 - dummy sync flag']
  #allocation27 [shape = 's32[]', space=sflag, size = 0x4, offset = 0, fixed_abs, tag = 'sflag constant byte address 0x0 - dummy sync flag']
  #allocation28 [shape = 's32[]', space=sflag, size = 0x4, offset = 0, fixed_abs, tag = 'sflag constant byte address 0x0 - dummy sync flag']
  #allocation29 [shape = 's32[]', space=sflag, size = 0x4, offset = 0, fixed_abs, tag = 'sflag constant byte address 0x0 - dummy sync flag']
  #allocation30 [shape = 's32[]', space=sflag, size = 0x4, offset = 0, fixed_abs, tag = 'sflag constant byte address 0x0 - dummy sync flag']
  #allocation31 [shape = 's32[]', space=sflag, size = 0x4, offset = 0, fixed_abs, tag = 'sflag constant byte address 0x0 - dummy sync flag']
  #allocation32 [shape = 's32[]', space=sflag, size = 0x4, offset = 0, fixed_abs, tag = 'sflag constant byte address 0x0 - dummy sync flag']
  #allocation33 [shape = 's32[]', space=sflag, size = 0x4, offset = 0, fixed_abs, tag = 'sflag constant byte address 0x0 - dummy sync flag']
  #allocation34 [shape = 's32[]', space=sflag, size = 0x4, offset = 0, fixed_abs, tag = 'sflag constant byte address 0x0 - dummy sync flag']
  #allocation35 [shape = 's32[]', space=sflag, size = 0x4, offset = 0, fixed_abs, tag = 'sflag constant byte address 0x0 - dummy sync flag']
  #allocation36 [shape = 's32[]', space=sflag, size = 0x4, offset = 0, fixed_abs, tag = 'sflag constant byte address 0x0 - dummy sync flag']
  #allocation37 [shape = 's32[]', space=sflag, size = 0x4, offset = 0, fixed_abs, tag = 'sflag constant byte address 0x0 - dummy sync flag']
  %s0 = inlined_call_operand.hbm [shape: s32[32], index: 0, kind: input, shape index: {}]
  %s1 = inlined_call_operand.vmem [shape: s32[32], index: 1, kind: input, shape index: {}]
  %s2 = inlined_call_operand.vmem [shape: s32[128], index: 2, kind: input, shape index: {}]
  %s3 = inlined_call_operand.hbm [shape: s32[512,128], index: 3, kind: input, shape index: {}]
  %s4 = inlined_call_operand.hbm [shape: s32[512,128], index: 4, kind: input, shape index: {}]
  %s5 = inlined_call_operand.hbm [shape: f32[2,2,8,128], index: 5, kind: output, shape index: {}]
  %s6 = sld [smem:[#allocation0]]
  $region102: #{tpu_custom_call.1} parent=0
    _
  %s8 = ssub.s32 1, %s6
  %s9 = scalar_select 0, %s8, %s6
  %11 = dma.hbm_to_smem %s0, 16, [#allocation7], [#allocation6]
  %s12 = sshll.u32 %s1, 4
  %s13 = int_to_ptr.vmem [resolvable:$true] %s12
  %15 = dma.vmem_to_smem %s13, 16, [#allocation8], [#allocation6]
  %s16 = sshll.u32 %s2, 4
  %s17 = int_to_ptr.vmem [resolvable:$true] %s16
  %19 = dma.vmem_to_smem %s17, 16, [#allocation9], [#allocation6]
  %20 = dma.done [#allocation6], 48
  %21 = sfence
  $region1: #{tpu_custom_call.1} parent=0
    #allocation10 [shape = 'u8[8192]{0}', space=vmem, size = 0x2000, scoped, tag = 'output window, operand 0']
    #allocation11 [shape = 's32[2]{0}', space=sflag, size = 0x8, scoped, tag = 'scoped memory for tpu_custom_call.1']
    %22 = vsyncpa [#allocation11], 0
    %s23 = scalar_lea.sflag [#allocation11], 1
    %24 = vsyncpa %s23, 0
    loop: start=0, step=1, limit=5
    $region2: #{tpu_custom_call.1} parent=1 // loop_pre_header
      _
    $region3: #{tpu_custom_call.1} parent=1 // loop_header
      %s26 = sphi 0, %s30
      %p27 = scmp.ge.s32.totalorder %s26, 5
      %s32 = sphi 0, %s42
      %s33 = sphi 0, %s38
      %s34 = sphi 0, %s32
      %s35 = sphi 0, %s33
      %s47 = sphi 0, %s49
      %s50 = sphi 0, %s47
      %s60 = sphi 0, %s50
    $region4: #{tpu_custom_call.1} parent=1 // loop_header_branch
      %29 = sbr.rel (%p27) target = $region8
    $region5: #{tpu_custom_call.1} parent=1 // loop_body
      %s31 = ssub.s32 %s26, 1
      %s36 = sadd.s32 1, %s33
      %p37 = scmp.ge.s32.totalorder %s36, 2
      %s38 = scalar_select %p37, 0, %s36
      %s39 = sadd.s32 1, %s32
      %s40 = scalar_select %p37, %s39, %s32
      %p41 = scmp.ge.s32.totalorder %s40, 2
      %s42 = scalar_select %p41, 0, %s40
      %s43 = ssub.s32 %s32, %s42
      %s44 = ssub.s32 %s33, %s38
      %s45 = sor.u32 %s43, %s44
      %p46 = scmp.eq.s32.totalorder %s45, 0
      %s48 = sadd.s32 %s47, 1
      %s49 = scalar_select %p46, %s47, %s48
      %p51 = pneg %p46
      %p52 = scmp.eq.s32.totalorder %s26, 3
      %p53 = por %p51, %p52
      %p54 = scmp.ne.s32.totalorder %s47, %s50
      %p55 = scmp.eq.s32.totalorder %s26, 0
      %p56 = por %p54, %p55
      %p57 = scmp.ne.s32.totalorder %s47, %s50
      %p58 = scmp.eq.s32.totalorder %s31, 3
      %p59 = por %p57, %p58
      %p61 = scmp.ne.s32.totalorder %s50, %s60
      %p62 = scmp.eq.s32.totalorder %s31, 0
      %p63 = por %p61, %p62
      %p64 = scmp.lt.s32.totalorder %s26, 4
      // Predicated region
      $region9: #{tpu_custom_call.1} parent=5 // pred_check
        %p65 = pneg %p64
      $region10: #{tpu_custom_call.1} parent=5 // pred_check_branch
        %67 = sbr.rel (%p65) target = $region12
      $region11: #{tpu_custom_call.1} parent=5 // pred_region
        %p68 = pneg %p56
        %p69 = pneg %p53
        %s70 = sand.u32 %s47, 1
        %s71 = scalar_lea.sflag [#allocation11], %s70
        %s72 = sand.u32 %s47, 1
        %s73 = smul.addr %s72, 8
        %s74 = scalar_lea.vmem [#allocation10], %s73
        %s75 = smul.u32 %s32, 2
        %s76 = sadd.s32 %s75, %s33
        %p77 = scmp.lt.s32.totalorder %s33, 0
        %s78 = ssub.s32 0, %s33
        %s79 = scalar_select %p77, %s78, %s33
        %s80 = sand.u32 %s79, 1
        %s81 = ssub.s32 0, %s80
        %s82 = scalar_select %p77, %s81, %s80
        %p83 = scmp.ne.s32.totalorder %s82, 0
        %p84 = scmp.lt.s32.totalorder %s82, 0
        %p85 = pnand %p84, %p83
        %p86 = pneg %p85
        %s87 = sadd.s32 %s82, 2
        %s88 = scalar_select %p86, %s87, %s82
        %p89 = scmp.eq.s32.totalorder %s33, 0
        // Predicated region
        $region13: #{tpu_custom_call.1} parent=11 // pred_check
          %p90 = pneg %p89
        $region14: #{tpu_custom_call.1} parent=11 // pred_check_branch
          %92 = sbr.rel (%p90) target = $region16
        $region15: #{tpu_custom_call.1} parent=11 // pred_region
          %s93 = smul.u32 %s76, 8
          loop: start=0, step=1, limit=8
          $region17: #{tpu_custom_call.1} parent=15 // loop_pre_header
            _
          $region18: #{tpu_custom_call.1} parent=15 // loop_header
            %s95 = sphi 0, %s99
            %p96 = scmp.ge.s32.totalorder %s95, 8
          $region19: #{tpu_custom_call.1} parent=15 // loop_header_branch
            %98 = sbr.rel (%p96) target = $region23
          $region20: #{tpu_custom_call.1} parent=15 // loop_body
            %s100 = sadd.s32 %s93, %s95
            %s101 = sld [smem:[#allocation7 + %s100]]
            %s102 = smul.addr %s101, 16
            %s103 = scalar_lea.hbm %s3, %s102
            %s104 = smul.u32 %s88, 8
            %s105 = sadd.s32 %s95, %s104
            %s106 = scalar_lea.vmem [#allocation2], %s105
            %s107 = smul.u32 %s88, 3
            %s108 = scalar_lea.sflag [#allocation5], %s107
            // Predicated region
            $region24: #{tpu_custom_call.1} parent=20 // pred_check
              _
            $region25: #{tpu_custom_call.1} parent=20 // pred_check_branch
              %110 = sbr.rel target = $region27
            $region26: #{tpu_custom_call.1} parent=20 // pred_region
              %111 = sst [smem:[#allocation14]] [#allocation13]
              %112 = sst [smem:[#allocation15]] [#allocation12]
            $region27: #{tpu_custom_call.1} parent=20 // pred_fallthru
              _
            %114 = shalt.err (0)
            %s116 = sshll.u32 %s106, 4
            %s117 = int_to_ptr.vmem [resolvable:$true] %s116
            %119 = dma.hbm_to_vmem [thread:$0]  %s103, 16, %s117, %s108
            %s120 = sld [smem:[#allocation8 + %s100]]
            %s121 = smul.addr %s120, 16
            %s122 = scalar_lea.hbm %s4, %s121
            %s123 = scalar_lea.vmem [#allocation3], %s105
            %s124 = sadd.s32 1, %s107
            %s125 = scalar_lea.sflag [#allocation5], %s124
            // Predicated region
            $region28: #{tpu_custom_call.1} parent=20 // pred_check
              _
            $region29: #{tpu_custom_call.1} parent=20 // pred_check_branch
              %127 = sbr.rel target = $region31
            $region30: #{tpu_custom_call.1} parent=20 // pred_region
              %128 = sst [smem:[#allocation14]] [#allocation17]
              %129 = sst [smem:[#allocation15]] [#allocation16]
            $region31: #{tpu_custom_call.1} parent=20 // pred_fallthru
              _
            %131 = shalt.err (0)
            %s133 = sshll.u32 %s123, 4
            %s134 = int_to_ptr.vmem [resolvable:$true] %s133
            %136 = dma.hbm_to_vmem [thread:$0]  %s122, 16, %s134, %s125
            %s137 = smul.u32 %s100, 4
            %s138 = sld [smem:[#allocation9 + %s137]]
            %s139 = smul.addr %s138, 16
            %s140 = scalar_lea.hbm %s4, %s139
            %s141 = smul.u32 %s88, 32
            %s142 = sadd.s32 %s95, %s141
            %s143 = scalar_lea.vmem [#allocation4], %s142
            %s144 = sadd.s32 2, %s107
            %s145 = scalar_lea.sflag [#allocation5], %s144
            // Predicated region
            $region32: #{tpu_custom_call.1} parent=20 // pred_check
              _
            $region33: #{tpu_custom_call.1} parent=20 // pred_check_branch
              %147 = sbr.rel target = $region35
            $region34: #{tpu_custom_call.1} parent=20 // pred_region
              %148 = sst [smem:[#allocation14]] [#allocation19]
              %149 = sst [smem:[#allocation15]] [#allocation18]
            $region35: #{tpu_custom_call.1} parent=20 // pred_fallthru
              _
            %151 = shalt.err (0)
            %s153 = sshll.u32 %s143, 4
            %s154 = int_to_ptr.vmem [resolvable:$true] %s153
            %156 = dma.hbm_to_vmem [thread:$0]  %s140, 16, %s154, %s145
            %s157 = sadd.s32 %s137, 1
            %s158 = sld [smem:[#allocation9 + %s157]]
            %s159 = smul.addr %s158, 16
            %s160 = scalar_lea.hbm %s4, %s159
            %s161 = sadd.s32 %s95, 8
            %s162 = sadd.s32 %s161, %s141
            %s163 = scalar_lea.vmem [#allocation4], %s162
            // Predicated region
            $region36: #{tpu_custom_call.1} parent=20 // pred_check
              _
            $region37: #{tpu_custom_call.1} parent=20 // pred_check_branch
              %165 = sbr.rel target = $region39
            $region38: #{tpu_custom_call.1} parent=20 // pred_region
              %166 = sst [smem:[#allocation14]] [#allocation21]
              %167 = sst [smem:[#allocation15]] [#allocation20]
            $region39: #{tpu_custom_call.1} parent=20 // pred_fallthru
              _
            %169 = shalt.err (0)
            %s171 = sshll.u32 %s163, 4
            %s172 = int_to_ptr.vmem [resolvable:$true] %s171
            %174 = dma.hbm_to_vmem [thread:$0]  %s160, 16, %s172, %s145
            %s175 = sadd.s32 %s137, 2
            %s176 = sld [smem:[#allocation9 + %s175]]
            %s177 = smul.addr %s176, 16
            %s178 = scalar_lea.hbm %s4, %s177
            %s179 = sadd.s32 %s95, 16
            %s180 = sadd.s32 %s179, %s141
            %s181 = scalar_lea.vmem [#allocation4], %s180
            // Predicated region
            $region40: #{tpu_custom_call.1} parent=20 // pred_check
              _
            $region41: #{tpu_custom_call.1} parent=20 // pred_check_branch
              %183 = sbr.rel target = $region43
            $region42: #{tpu_custom_call.1} parent=20 // pred_region
              %184 = sst [smem:[#allocation14]] [#allocation23]
              %185 = sst [smem:[#allocation15]] [#allocation22]
            $region43: #{tpu_custom_call.1} parent=20 // pred_fallthru
              _
            %187 = shalt.err (0)
            %s189 = sshll.u32 %s181, 4
            %s190 = int_to_ptr.vmem [resolvable:$true] %s189
            %192 = dma.hbm_to_vmem [thread:$0]  %s178, 16, %s190, %s145
            %s193 = sadd.s32 %s137, 3
            %s194 = sld [smem:[#allocation9 + %s193]]
            %s195 = smul.addr %s194, 16
            %s196 = scalar_lea.hbm %s4, %s195
            %s197 = sadd.s32 %s95, 24
            %s198 = sadd.s32 %s197, %s141
            %s199 = scalar_lea.vmem [#allocation4], %s198
            // Predicated region
            $region44: #{tpu_custom_call.1} parent=20 // pred_check
              _
            $region45: #{tpu_custom_call.1} parent=20 // pred_check_branch
              %201 = sbr.rel target = $region47
            $region46: #{tpu_custom_call.1} parent=20 // pred_region
              %202 = sst [smem:[#allocation14]] [#allocation25]
              %203 = sst [smem:[#allocation15]] [#allocation24]
            $region47: #{tpu_custom_call.1} parent=20 // pred_fallthru
              _
            %205 = shalt.err (0)
            %s207 = sshll.u32 %s199, 4
            %s208 = int_to_ptr.vmem [resolvable:$true] %s207
            %210 = dma.hbm_to_vmem [thread:$0]  %s196, 16, %s208, %s145
          $region21: #{tpu_custom_call.1} parent=15 // loop_footer
            %s99 = sadd.s32 1, %s95
          $region22: #{tpu_custom_call.1} parent=15 // loop_footer_branch
            %94 = sbr.rel target = $region18
          $region23: #{tpu_custom_call.1} parent=15 // loop_exit
            _
        $region16: #{tpu_custom_call.1} parent=11 // pred_fallthru
          _
        %s211 = sadd.s32 %s33, 1
        %p212 = scmp.lt.s32.totalorder %s211, 2
        // Predicated region
        $region48: #{tpu_custom_call.1} parent=11 // pred_check
          %p213 = pneg %p212
        $region49: #{tpu_custom_call.1} parent=11 // pred_check_branch
          %215 = sbr.rel (%p213) target = $region51
        $region50: #{tpu_custom_call.1} parent=11 // pred_region
          %s216 = sadd.s32 %s76, 1
          %s217 = ssub.s32 1, %s88
          %s218 = smul.u32 %s216, 8
          loop: start=0, step=1, limit=8
          $region52: #{tpu_custom_call.1} parent=50 // loop_pre_header
            _
          $region53: #{tpu_custom_call.1} parent=50 // loop_header
            %s220 = sphi 0, %s224
            %p221 = scmp.ge.s32.totalorder %s220, 8
          $region54: #{tpu_custom_call.1} parent=50 // loop_header_branch
            %223 = sbr.rel (%p221) target = $region58
          $region55: #{tpu_custom_call.1} parent=50 // loop_body
            %s225 = sadd.s32 %s218, %s220
            %s226 = sld [smem:[#allocation7 + %s225]]
            %s227 = smul.addr %s226, 16
            %s228 = scalar_lea.hbm %s3, %s227
            %s229 = smul.u32 %s217, 8
            %s230 = sadd.s32 %s220, %s229
            %s231 = scalar_lea.vmem [#allocation2], %s230
            %s232 = smul.u32 %s217, 3
            %s233 = scalar_lea.sflag [#allocation5], %s232
            // Predicated region
            $region59: #{tpu_custom_call.1} parent=55 // pred_check
              _
            $region60: #{tpu_custom_call.1} parent=55 // pred_check_branch
              %235 = sbr.rel target = $region62
            $region61: #{tpu_custom_call.1} parent=55 // pred_region
              %236 = sst [smem:[#allocation14]] [#allocation27]
              %237 = sst [smem:[#allocation15]] [#allocation26]
            $region62: #{tpu_custom_call.1} parent=55 // pred_fallthru
              _
            %239 = shalt.err (0)
            %s241 = sshll.u32 %s231, 4
            %s242 = int_to_ptr.vmem [resolvable:$true] %s241
            %244 = dma.hbm_to_vmem [thread:$0]  %s228, 16, %s242, %s233
            %s245 = sld [smem:[#allocation8 + %s225]]
            %s246 = smul.addr %s245, 16
            %s247 = scalar_lea.hbm %s4, %s246
            %s248 = scalar_lea.vmem [#allocation3], %s230
            %s249 = sadd.s32 1, %s232
            %s250 = scalar_lea.sflag [#allocation5], %s249
            // Predicated region
            $region63: #{tpu_custom_call.1} parent=55 // pred_check
              _
            $region64: #{tpu_custom_call.1} parent=55 // pred_check_branch
              %252 = sbr.rel target = $region66
            $region65: #{tpu_custom_call.1} parent=55 // pred_region
              %253 = sst [smem:[#allocation14]] [#allocation29]
              %254 = sst [smem:[#allocation15]] [#allocation28]
            $region66: #{tpu_custom_call.1} parent=55 // pred_fallthru
              _
            %256 = shalt.err (0)
            %s258 = sshll.u32 %s248, 4
            %s259 = int_to_ptr.vmem [resolvable:$true] %s258
            %261 = dma.hbm_to_vmem [thread:$0]  %s247, 16, %s259, %s250
            %s262 = smul.u32 %s225, 4
            %s263 = sld [smem:[#allocation9 + %s262]]
            %s264 = smul.addr %s263, 16
            %s265 = scalar_lea.hbm %s4, %s264
            %s266 = smul.u32 %s217, 32
            %s267 = sadd.s32 %s220, %s266
            %s268 = scalar_lea.vmem [#allocation4], %s267
            %s269 = sadd.s32 2, %s232
            %s270 = scalar_lea.sflag [#allocation5], %s269
            // Predicated region
            $region67: #{tpu_custom_call.1} parent=55 // pred_check
              _
            $region68: #{tpu_custom_call.1} parent=55 // pred_check_branch
              %272 = sbr.rel target = $region70
            $region69: #{tpu_custom_call.1} parent=55 // pred_region
              %273 = sst [smem:[#allocation14]] [#allocation31]
              %274 = sst [smem:[#allocation15]] [#allocation30]
            $region70: #{tpu_custom_call.1} parent=55 // pred_fallthru
              _
            %276 = shalt.err (0)
            %s278 = sshll.u32 %s268, 4
            %s279 = int_to_ptr.vmem [resolvable:$true] %s278
            %281 = dma.hbm_to_vmem [thread:$0]  %s265, 16, %s279, %s270
            %s282 = sadd.s32 %s262, 1
            %s283 = sld [smem:[#allocation9 + %s282]]
            %s284 = smul.addr %s283, 16
            %s285 = scalar_lea.hbm %s4, %s284
            %s286 = sadd.s32 %s220, 8
            %s287 = sadd.s32 %s286, %s266
            %s288 = scalar_lea.vmem [#allocation4], %s287
            // Predicated region
            $region71: #{tpu_custom_call.1} parent=55 // pred_check
              _
            $region72: #{tpu_custom_call.1} parent=55 // pred_check_branch
              %290 = sbr.rel target = $region74
            $region73: #{tpu_custom_call.1} parent=55 // pred_region
              %291 = sst [smem:[#allocation14]] [#allocation33]
              %292 = sst [smem:[#allocation15]] [#allocation32]
            $region74: #{tpu_custom_call.1} parent=55 // pred_fallthru
              _
            %294 = shalt.err (0)
            %s296 = sshll.u32 %s288, 4
            %s297 = int_to_ptr.vmem [resolvable:$true] %s296
            %299 = dma.hbm_to_vmem [thread:$0]  %s285, 16, %s297, %s270
            %s300 = sadd.s32 %s262, 2
            %s301 = sld [smem:[#allocation9 + %s300]]
            %s302 = smul.addr %s301, 16
            %s303 = scalar_lea.hbm %s4, %s302
            %s304 = sadd.s32 %s220, 16
            %s305 = sadd.s32 %s304, %s266
            %s306 = scalar_lea.vmem [#allocation4], %s305
            // Predicated region
            $region75: #{tpu_custom_call.1} parent=55 // pred_check
              _
            $region76: #{tpu_custom_call.1} parent=55 // pred_check_branch
              %308 = sbr.rel target = $region78
            $region77: #{tpu_custom_call.1} parent=55 // pred_region
              %309 = sst [smem:[#allocation14]] [#allocation35]
              %310 = sst [smem:[#allocation15]] [#allocation34]
            $region78: #{tpu_custom_call.1} parent=55 // pred_fallthru
              _
            %312 = shalt.err (0)
            %s314 = sshll.u32 %s306, 4
            %s315 = int_to_ptr.vmem [resolvable:$true] %s314
            %317 = dma.hbm_to_vmem [thread:$0]  %s303, 16, %s315, %s270
            %s318 = sadd.s32 %s262, 3
            %s319 = sld [smem:[#allocation9 + %s318]]
            %s320 = smul.addr %s319, 16
            %s321 = scalar_lea.hbm %s4, %s320
            %s322 = sadd.s32 %s220, 24
            %s323 = sadd.s32 %s322, %s266
            %s324 = scalar_lea.vmem [#allocation4], %s323
            // Predicated region
            $region79: #{tpu_custom_call.1} parent=55 // pred_check
              _
            $region80: #{tpu_custom_call.1} parent=55 // pred_check_branch
              %326 = sbr.rel target = $region82
            $region81: #{tpu_custom_call.1} parent=55 // pred_region
              %327 = sst [smem:[#allocation14]] [#allocation37]
              %328 = sst [smem:[#allocation15]] [#allocation36]
            $region82: #{tpu_custom_call.1} parent=55 // pred_fallthru
              _
            %330 = shalt.err (0)
            %s332 = sshll.u32 %s324, 4
            %s333 = int_to_ptr.vmem [resolvable:$true] %s332
            %335 = dma.hbm_to_vmem [thread:$0]  %s321, 16, %s333, %s270
          $region56: #{tpu_custom_call.1} parent=50 // loop_footer
            %s224 = sadd.s32 1, %s220
          $region57: #{tpu_custom_call.1} parent=50 // loop_footer_branch
            %219 = sbr.rel target = $region53
          $region58: #{tpu_custom_call.1} parent=50 // loop_exit
            _
        $region51: #{tpu_custom_call.1} parent=11 // pred_fallthru
          _
        loop: start=0, step=1, limit=8
        $region83: #{tpu_custom_call.1} parent=11 // loop_pre_header
          _
        $region84: #{tpu_custom_call.1} parent=11 // loop_header
          %s337 = sphi 0, %s341
          %p338 = scmp.ge.s32.totalorder %s337, 8
        $region85: #{tpu_custom_call.1} parent=11 // loop_header_branch
          %340 = sbr.rel (%p338) target = $region89
        $region86: #{tpu_custom_call.1} parent=11 // loop_body
          %s342 = smul.u32 %s88, 3
          %s343 = scalar_lea.sflag [#allocation5], %s342
          %s344 = smul.u32 1, 1
          %s345 = sshll.u32 %s344, 4
          %346 = dma.done %s343, %s345
          %s347 = sadd.s32 1, %s342
          %s348 = scalar_lea.sflag [#allocation5], %s347
          %s349 = sshll.u32 %s344, 4
          %350 = dma.done %s348, %s349
          %s351 = sadd.s32 2, %s342
          %s352 = scalar_lea.sflag [#allocation5], %s351
          %s353 = sshll.u32 %s344, 4
          %354 = dma.done %s352, %s353
          %s355 = sshll.u32 %s344, 4
          %356 = dma.done %s352, %s355
          %s357 = sshll.u32 %s344, 4
          %358 = dma.done %s352, %s357
          %s359 = sshll.u32 %s344, 4
          %360 = dma.done %s352, %s359
        $region87: #{tpu_custom_call.1} parent=11 // loop_footer
          %s341 = sadd.s32 1, %s337
        $region88: #{tpu_custom_call.1} parent=11 // loop_footer_branch
          %336 = sbr.rel target = $region84
        $region89: #{tpu_custom_call.1} parent=11 // loop_exit
          _
        %s361 = smul.u32 %s88, 8
        %s362 = scalar_lea.vmem [#allocation2], %s361
        %v363 = vld [vmem:[%s362] sm:$0xff]
        %v364 = vshll.u32 %v363, 16
        %v366 = vand.u32 %v363, 4294901760
        %s368 = scalar_lea.vmem [#allocation3], %s361
        %v369 = vld [vmem:[%s368] sm:$0xff]
        %v370 = vshll.u32 %v369, 16
        %v372 = vand.u32 %v369, 4294901760
        %s374 = smul.u32 %s88, 32
        %s375 = scalar_lea.vmem [#allocation4], %s374
        %v376 = vld [vmem:[%s375] sm:$0xff]
        %v377 = vld [vmem:[%s375 + $0x8] sm:$0xff]
        %v378 = vld [vmem:[%s375 + $0x10] sm:$0xff]
        %v379 = vld [vmem:[%s375 + $0x18] sm:$0xff]
        %v380 = vshll.u32 %v376, 16
        %v381 = vshll.u32 %v377, 16
        %v382 = vshll.u32 %v378, 16
        %v383 = vshll.u32 %v379, 16
        %v388 = vand.u32 %v376, 4294901760
        %v389 = vand.u32 %v377, 4294901760
        %v390 = vand.u32 %v378, 4294901760
        %v391 = vand.u32 %v379, 4294901760
        %v396 = vadd.f32 %v380, %v381
        %v397 = vadd.f32 %v396, %v382
        %v398 = vadd.f32 %v397, %v383
        %v399 = vadd.f32 %v388, %v389
        %v400 = vadd.f32 %v399, %v390
        %v401 = vadd.f32 %v400, %v391
        %v402 = vmul.f32 %v364, %v370
        %v403 = vmul.f32 %v366, %v372
        %v404 = vadd.f32 %v402, %v403
        %405 = vadd.xlane.f32.xlu0 %v404
        %v406 = vpop.xlane.xlu0 %405
        %v407 = vmul.f32 %v364, %v398
        %v408 = vmul.f32 %v366, %v401
        %v409 = vadd.f32 %v407, %v408
        %410 = vadd.xlane.f32.xlu0 %v409
        %v411 = vpop.xlane.xlu0 %410
        %v412 = vmin.f32 %v406, 0.0
        %v413 = vand.u32 2147483647, %v406
        %v414 = vsub.f32 0.0, %v413
        %v415 = vmul.f32 %v414, 1.442695
        %v416 = vpow.pop %v415
        %v417 = vadd.f32 %v416, 1.0
        %v418 = vlog2.pop %v417
        %v419 = vmul.f32 %v418, 0.6931472
        %v420 = vmul.f32 -0.5, %v416
        %v421 = vadd.f32 %v420, 1.0
        %v422 = vmul.f32 %v421, %v416
        %v423 = vand.u32 2147483647, %v416
        %vm424 = vcmp.lt.f32.partialorder %v423, 0.0004427343
        %v425 = vsel %vm424, %v422, %v419
        %v426 = vsub.f32 %v412, %v425
        %v427 = vsub.f32 0.0, %v411
        %v428 = vmin.f32 %v427, 0.0
        %v429 = vand.u32 2147483647, %v427
        %v430 = vsub.f32 0.0, %v429
        %v431 = vmul.f32 %v430, 1.442695
        %v432 = vpow.pop %v431
        %v433 = vadd.f32 %v432, 1.0
        %v434 = vlog2.pop %v433
        %v435 = vmul.f32 %v434, 0.6931472
        %v436 = vmul.f32 -0.5, %v432
        %v437 = vadd.f32 %v436, 1.0
        %v438 = vmul.f32 %v437, %v432
        %v439 = vand.u32 2147483647, %v432
        %vm440 = vcmp.lt.f32.partialorder %v439, 0.0004427343
        %v441 = vsel %vm440, %v438, %v435
        %v442 = vsub.f32 %v428, %v441
        %v443 = vadd.f32 %v426, %v442
        %s444 = smul.u32 %s76, 8
        %v445 = vlaneseq
        %v446 = vshrl.u32 %v445, 7
        %v447 = vstv %s444
        %v448 = vadd.s32 %v447, %v446
        %vm449 = vcmp.lt.s32.totalorder %v448, 30
        %v450 = vsel %vm449, %v443, 0.0
        %vm451 = vcmask 7168
        %v452 = vsel %vm451, %v450, 0.0
        %453 = vadd.xlane.f32.xlu0 %v452
        %v454 = vpop.xlane.xlu0 %453
        %v455 = vrot.slane %v454, 4
        %v456 = vadd.f32 %v454, %v455
        %v457 = vrot.slane %v456, 2
        %v458 = vadd.f32 %v456, %v457
        %v459 = vrot.slane %v458, 1
        %v460 = vadd.f32 %v458, %v459
        %s461 = vtos %v460
        %v462 = vstv %s461
        %463 = vst [vmem:[%s74] sm:$0xff] %v462
        %s464 = sand.u32 %s47, 1
        %s465 = scalar_lea.sflag [#allocation11], %s464
        %s466 = sand.u32 %s47, 1
        %s467 = smul.addr %s466, 8
        %s468 = scalar_lea.vmem [#allocation10], %s467
        // Predicated region
        $region90: #{tpu_custom_call.1} parent=11 // pred_check
          %p469 = pneg %p53
        $region91: #{tpu_custom_call.1} parent=11 // pred_check_branch
          %471 = sbr.rel (%p469) target = $region93
        $region92: #{tpu_custom_call.1} parent=11 // pred_region
          %s473 = ssub.s32 128, 128
          %474 = vsyncadd %s465, %s473
          %s475 = smul.addr %s32, 2
          %s476 = sadd.s32 %s33, %s475
          %s477 = smul.addr %s476, 128
          %s478 = scalar_lea.hbm %s5, %s477
          %s480 = sshll.u32 %s468, 4
          %s481 = int_to_ptr.vmem [resolvable:$true] %s480
          %483 = dma.vmem_to_hbm [thread:$0]  %s481, 128, %s478, %s465
        $region93: #{tpu_custom_call.1} parent=11 // pred_fallthru
          _
      $region12: #{tpu_custom_call.1} parent=5 // pred_fallthru
        _
      %p484 = scmp.le.s32.totalorder 1, %s26
      // Predicated region
      $region94: #{tpu_custom_call.1} parent=5 // pred_check
        %p485 = pneg %p484
      $region95: #{tpu_custom_call.1} parent=5 // pred_check_branch
        %487 = sbr.rel (%p485) target = $region97
      $region96: #{tpu_custom_call.1} parent=5 // pred_region
        %s488 = ssub.s32 %s26, 1
        // Predicated region
        $region98: #{tpu_custom_call.1} parent=96 // pred_check
          %p489 = pneg %p59
        $region99: #{tpu_custom_call.1} parent=96 // pred_check_branch
          %491 = sbr.rel (%p489) target = $region101
        $region100: #{tpu_custom_call.1} parent=96 // pred_region
          %s492 = sand.u32 %s50, 1
          %s493 = scalar_lea.sflag [#allocation11], %s492
          %s494 = sand.u32 %s50, 1
          %s495 = smul.addr %s494, 8
          %s496 = scalar_lea.vmem [#allocation10], %s495
          %497 = dma.done %s493, 128
        $region101: #{tpu_custom_call.1} parent=96 // pred_fallthru
          _
      $region97: #{tpu_custom_call.1} parent=5 // pred_fallthru
        _
    $region6: #{tpu_custom_call.1} parent=1 // loop_footer
      %s30 = sadd.s32 1, %s26
    $region7: #{tpu_custom_call.1} parent=1 // loop_footer_branch
      %25 = sbr.rel target = $region3
    $region8: #{tpu_custom_call.1} parent=1 // loop_exit
      _
    %498 = vsyncpa [#allocation11], 1
    %s499 = scalar_lea.sflag [#allocation11], 1
    %500 = vsyncpa %s499, 1
  %501 = vsyncmov [#allocation5]
  %s502 = vpop.sfrf %501
  %p503 = scmp.eq.s32.totalorder %s502, 0
  %p504 = pneg %p503
  %506 = shalt.err (%p504)
  %s507 = scalar_lea.sflag [#allocation5], 1
  %508 = vsyncmov %s507
  %s509 = vpop.sfrf %508
  %p510 = scmp.eq.s32.totalorder %s509, 0
  %p511 = pneg %p510
  %513 = shalt.err (%p511)
  %s514 = scalar_lea.sflag [#allocation5], 2
  %515 = vsyncmov %s514
  %s516 = vpop.sfrf %515
  %p517 = scmp.eq.s32.totalorder %s516, 0
  %p518 = pneg %p517
  %520 = shalt.err (%p518)
  %s521 = scalar_lea.sflag [#allocation5], 3
  %522 = vsyncmov %s521
  %s523 = vpop.sfrf %522
  %p524 = scmp.eq.s32.totalorder %s523, 0
  %p525 = pneg %p524
  %527 = shalt.err (%p525)
  %s528 = scalar_lea.sflag [#allocation5], 4
  %529 = vsyncmov %s528
  %s530 = vpop.sfrf %529
  %p531 = scmp.eq.s32.totalorder %s530, 0
  %p532 = pneg %p531
  %534 = shalt.err (%p532)
  %s535 = scalar_lea.sflag [#allocation5], 5
  %536 = vsyncmov %s535
  %s537 = vpop.sfrf %536
  %p538 = scmp.eq.s32.totalorder %s537, 0
  %p539 = pneg %p538
  %541 = shalt.err (%p539)

</llo_original>
